<compile_context>
chip_gen: v5e
topology: v5e:2x2
jax: 0.10.0
libtpu: 0.0.40
codegen_flags: <defaults>
</compile_context>

<pallas_src>
import jax
import jax.numpy as jnp
from jax.experimental import pallas as pl
from jax.experimental.pallas import tpu as pltpu


def _round_up(v: int, m: int) -> int:
    return -(-v // m) * m


def _lane_pad(c: int) -> int:
    return _round_up(c, 128)


def _downdim_kernel(x_ref, wt_ref, b_ref, o_ref):
    # x_ref  : (tm, K)   tile of packed tokens (r tokens per row)
    # wt_ref : (K, N)    block-diagonally replicated 1x1-conv weight (grid-invariant)
    # b_ref  : (1, N)    f32 bias, tiled r times (grid-invariant)
    # o_ref  : (tm, N)
    acc = jnp.dot(x_ref[...], wt_ref[...], preferred_element_type=jnp.float32)
    o_ref[...] = (acc + b_ref[...]).astype(o_ref.dtype)


def downdim(x, weight, bias, reso=None, *, block_rows=4096):
    """Pallas equivalent of Downdim(in_channel, out_channel, reso)(x).

    x      : (B, L, C_in)
    weight : (C_out, C_in)  (PyTorch Conv2d 1x1 weight, trailing 1x1 squeezed)
    bias   : (C_out,)
    reso   : optional (H, W); only used to check H*W == L (a 1x1 conv does
             not depend on the H/W split).
    """
    B, L, C_in = x.shape
    C_out, C_in_w = weight.shape
    assert C_in_w == C_in, (C_in_w, C_in)
    if reso is not None:
        H, W = reso
        assert H * W == L, (H, W, L)

    M = B * L
    itemsize = jnp.dtype(x.dtype).itemsize

    # ---- lane-dense packing factor ------------------------------------------
    # Pack r tokens per matrix row so the output width r*C_out fills the 128
    # lanes (unmasked stores) and the input width r*C_in has no lane padding.
    r = 1
    if 0 < C_out < 128 and 128 % C_out == 0:
        r = 128 // C_out
    while r > 1 and (M % r) != 0:
        r //= 2

    M2 = M // r
    K = r * C_in
    N = r * C_out

    x2 = x.reshape(M2, K)                          # free, contiguous reshape
    wt = weight.T.astype(x.dtype)                  # (C_in, C_out)
    if r > 1:
        # Block-diagonal replication: token j in a packed row only sees its
        # own channel slice.  Tiny one-time wrapper-side cost.
        wt = jnp.kron(jnp.eye(r, dtype=wt.dtype), wt)     # (K, N)
    b2 = jnp.tile(bias.astype(jnp.float32), (r,)).reshape(1, N)

    # ---- row-tile sizing from a VMEM budget ----------------------------------
    # This kernel is HBM-bandwidth bound; pick the largest tile that keeps the
    # double-buffered input+output tiles well under the scoped VMEM limit on
    # every generation (v7x has only 64 MiB physical / 32 MiB default scoped).
    row_bytes = (_lane_pad(K) + _lane_pad(N)) * itemsize   # lane-padded VMEM/row
    tile_budget = 8 * 1024 * 1024                          # per in+out tile pair
    tm = min(block_rows, max(8, tile_budget // row_bytes))
    if tm >= M2:
        tm = M2                                   # single full block (always legal)
    else:
        tm = max(8, (tm // 8) * 8)                # 8-sublane granularity
        if tm >= 512:
            tm = (tm // 256) * 256                # MXU-friendly alignment

    grid = (pl.cdiv(M2, tm),)                     # boundary block masked on store

    # Explicit scoped-VMEM limit (lane-padded sizes, double-buffered), capped
    # at 32 MiB which is safe on v5e/v6e (128 MiB phys) and v7x (64 MiB phys).
    w_vmem = 2 * _round_up(K, 8) * _lane_pad(N) * itemsize
    b_vmem = 2 * 8 * _lane_pad(N) * 4
    need = 2 * tm * row_bytes + w_vmem + b_vmem + (2 << 20)
    vmem_limit = int(min(32 << 20, max(need, 16 << 20)))

    cost = pl.CostEstimate(
        flops=2 * M * C_in * C_out,
        transcendentals=0,
        bytes_accessed=(M * (C_in + C_out) + C_in * C_out + C_out) * itemsize,
    )

    out = pl.pallas_call(
        _downdim_kernel,
        out_shape=jax.ShapeDtypeStruct((M2, N), x.dtype),
        grid_spec=pltpu.PrefetchScalarGridSpec(
            num_scalar_prefetch=0,
            grid=grid,
            in_specs=[
                pl.BlockSpec((tm, K), lambda i: (i, 0)),
                pl.BlockSpec((K, N), lambda i: (0, 0)),
                pl.BlockSpec((1, N), lambda i: (0, 0)),
            ],
            out_specs=pl.BlockSpec((tm, N), lambda i: (i, 0)),
        ),
        compiler_params=pltpu.CompilerParams(
            dimension_semantics=("parallel",),
            vmem_limit_bytes=vmem_limit,
        ),
        cost_estimate=cost,
    )(x2, wt, b2)

    # Free reshapes back to (B, L, C_out): packed rows unpack contiguously.
    return out.reshape(B, L, C_out)


if __name__ == "__main__":
    key = jax.random.PRNGKey(0)
    kx, kw, kb = jax.random.split(key, 3)

    # Small shapes consistent with the module: B=2, H=W=8 (L=64),
    # in_channel=32, out_channel=16.
    B, H, W = 2, 8, 8
    L = H * W
    C_in, C_out = 32, 16

    x = jax.random.normal(kx, (B, L, C_in), dtype=jnp.float32)
    weight = jax.random.normal(kw, (C_out, C_in), dtype=jnp.float32) * 0.1
    bias = jax.random.normal(kb, (C_out,), dtype=jnp.float32) * 0.1

    y = downdim(x, weight, bias, reso=(H, W))
    y = jax.block_until_ready(y)

    # Pure-JAX reference: the NCHW reshape + 1x1 conv + flatten-back is
    # exactly a per-token linear layer over the last dim.
    y_ref = jnp.einsum("blc,oc->blo", x, weight) + bias

    assert y.shape == (B, L, C_out), y.shape
    err = float(jnp.max(jnp.abs(y - y_ref)))
    assert jnp.allclose(y, y_ref, atol=1e-4, rtol=1e-4), err
    print("KERNEL_OK")
</pallas_src>

<mosaic_0001>
module attributes {stable_mosaic.version = 11 : i64} {
  func.func @_downdim_kernel(%arg0: i32, %arg1: memref<16x256xf32, #tpu.memory_space<vmem>>, %arg2: memref<256x128xf32, #tpu.memory_space<vmem>>, %arg3: memref<1x128xf32, #tpu.memory_space<vmem>>, %arg4: memref<16x128xf32, #tpu.memory_space<vmem>>) attributes {dimension_semantics = [#tpu.dimension_semantics<parallel>], iteration_bounds = array<i64: 1>, scalar_prefetch = 0 : i64, scratch_operands = 0 : i64, tpu.core_type = #tpu.core_type<tc>, window_params = [{transform_indices = @transform_0, window_bounds = array<i64: 16, 256>}, {pipeline_mode = #tpu.pipeline_mode<synchronous>, transform_indices = @transform_1, window_bounds = array<i64: 256, 128>}, {pipeline_mode = #tpu.pipeline_mode<synchronous>, transform_indices = @transform_2, window_bounds = array<i64: 1, 128>}, {transform_indices = @transform_3, window_bounds = array<i64: 16, 128>}]} {
    %c0 = arith.constant 0 : index
    %c0_0 = arith.constant 0 : index
    %0 = vector.load %arg1[%c0, %c0_0] : memref<16x256xf32, #tpu.memory_space<vmem>>, vector<16x256xf32>
    %c0_1 = arith.constant 0 : index
    %c0_2 = arith.constant 0 : index
    %1 = vector.load %arg2[%c0_1, %c0_2] : memref<256x128xf32, #tpu.memory_space<vmem>>, vector<256x128xf32>
    %cst = arith.constant dense<0.000000e+00> : vector<16x128xf32>
    %2 = tpu.matmul %0, %1, %cst {dimension_numbers = #tpu.dot_dimension_numbers<[1], [0], [0], [1], [0, 0, 1, 1], [], []>} : vector<16x256xf32>, vector<256x128xf32>, vector<16x128xf32> -> vector<16x128xf32>
    %c0_3 = arith.constant 0 : index
    %c0_4 = arith.constant 0 : index
    %3 = vector.load %arg3[%c0_3, %c0_4] : memref<1x128xf32, #tpu.memory_space<vmem>>, vector<1x128xf32>
    %4 = vector.broadcast %3 : vector<1x128xf32> to vector<16x128xf32>
    %5 = arith.addf %2, %4 : vector<16x128xf32>
    %c0_5 = arith.constant 0 : index
    %c0_6 = arith.constant 0 : index
    %6 = vector.load %arg4[%c0_5, %c0_6] : memref<16x128xf32, #tpu.memory_space<vmem>>, vector<16x128xf32>
    tpu.vector_store %arg4[%c0_5, %c0_6], %5 {strides = array<i32>} : memref<16x128xf32, #tpu.memory_space<vmem>>, vector<16x128xf32>,
    return
  }
  func.func @transform_0(%arg0: i32) -> (i32, i32) {
    %c0_i32 = arith.constant 0 : i32
    %c0_i32_0 = arith.constant 0 : i32
    return %arg0, %c0_i32 : i32, i32
  }
  func.func @transform_1(%arg0: i32) -> (i32, i32) {
    %c0_i32 = arith.constant 0 : i32
    %c0_i32_0 = arith.constant 0 : i32
    %c0_i32_1 = arith.constant 0 : i32
    return %c0_i32, %c0_i32_0 : i32, i32
  }
  func.func @transform_2(%arg0: i32) -> (i32, i32) {
    %c0_i32 = arith.constant 0 : i32
    %c0_i32_0 = arith.constant 0 : i32
    %c0_i32_1 = arith.constant 0 : i32
    return %c0_i32, %c0_i32_0 : i32, i32
  }
  func.func @transform_3(%arg0: i32) -> (i32, i32) {
    %c0_i32 = arith.constant 0 : i32
    %c0_i32_0 = arith.constant 0 : i32
    return %arg0, %c0_i32 : i32, i32
  }
}

</mosaic_0001>

<llo_original>
// kernel: tpu_custom_call.1
$region0: #{tpu_custom_call.1}
  #allocation0 [shape = 'u32[]', space=smem, size = 0x4, offset = 0x4, fixed_abs, tag = 'smem constant byte address 0x4 - core index']
  #allocation1 [shape = 'u32[72,128]{1,0:T(1,128)}', space=vmem, size = 0x9000, scoped, tag = 'internal scratch']
  %s0 = inlined_call_operand.hbm [shape: f32[16,256], index: 0, kind: input, shape index: {}]
  %s1 = inlined_call_operand.hbm [shape: f32[256,128], index: 1, kind: input, shape index: {}]
  %s2 = inlined_call_operand.vmem [shape: f32[1,128], index: 2, kind: input, shape index: {}]
  %s3 = inlined_call_operand.hbm [shape: f32[16,128], index: 3, kind: output, shape index: {}]
  %s4 = sld [smem:[#allocation0]]
  $region30: #{tpu_custom_call.1} parent=0
    _
  %s6 = ssub.s32 1, %s4
  %s7 = scalar_select 0, %s6, %s4
  $region1: #{tpu_custom_call.1} parent=0
    #allocation2 [shape = 'u8[16384]{0}', space=vmem, size = 0x4000, scoped, tag = 'input window, operand 0, single buffered']
    #allocation3 [shape = 's32[1]{0}', space=sflag, size = 0x4, scoped, tag = 'scoped memory for tpu_custom_call.1']
    #allocation4 [shape = 's32[1]{0}', space=sflag, size = 0x4, scoped, tag = 'scoped memory for tpu_custom_call.1']
    #allocation5 [shape = 'u8[131072]{0}', space=vmem, size = 0x20000, scoped, tag = 'input window, operand 1, single buffered']
    #allocation6 [shape = 's32[1]{0}', space=sflag, size = 0x4, scoped, tag = 'scoped memory for tpu_custom_call.1']
    #allocation7 [shape = 'u8[8192]{0}', space=vmem, size = 0x2000, scoped, tag = 'output window, operand 0, single buffered']
    %8 = vsyncpa [#allocation3], 0
    %9 = vsyncpa [#allocation6], 0
    %10 = vsyncpa [#allocation4], 0
    // Predicated region
    $region2: #{tpu_custom_call.1} parent=1 // pred_check
      _
    $region3: #{tpu_custom_call.1} parent=1 // pred_check_branch
      %12 = sbr.rel (0) target = $region5
    $region4: #{tpu_custom_call.1} parent=1 // pred_region
      %14 = vsyncadd [#allocation3], 0
      %s15 = sshll.u32 %s0, 4
      %s16 = int_to_ptr.hbm [resolvable:$true] %s15
      %s17 = sshll.u32 [#allocation2], 4
      %s18 = int_to_ptr.vmem [resolvable:$true] %s17
      %23 = dma.hbm_to_vmem [thread:$0]  %s16, 512, %s18, [#allocation3], 256, 256, 16
    $region5: #{tpu_custom_call.1} parent=1 // pred_fallthru
      _
    // Predicated region
    $region6: #{tpu_custom_call.1} parent=1 // pred_check
      _
    $region7: #{tpu_custom_call.1} parent=1 // pred_check_branch
      %25 = sbr.rel (0) target = $region9
    $region8: #{tpu_custom_call.1} parent=1 // pred_region
      %27 = vsyncadd [#allocation6], 0
      %s28 = sshll.u32 %s1, 4
      %s29 = int_to_ptr.hbm [resolvable:$true] %s28
      %s30 = sshll.u32 [#allocation5], 4
      %s31 = int_to_ptr.vmem [resolvable:$true] %s30
      %36 = dma.hbm_to_vmem [thread:$0]  %s29, 4096, %s31, [#allocation6], 128, 128, 8
    $region9: #{tpu_custom_call.1} parent=1 // pred_fallthru
      _
    // Predicated region
    $region10: #{tpu_custom_call.1} parent=1 // pred_check
      _
    $region11: #{tpu_custom_call.1} parent=1 // pred_check_branch
      %38 = sbr.rel (0) target = $region13
    $region12: #{tpu_custom_call.1} parent=1 // pred_region
      _
    $region13: #{tpu_custom_call.1} parent=1 // pred_fallthru
      _
    // Predicated region
    $region14: #{tpu_custom_call.1} parent=1 // pred_check
      _
    $region15: #{tpu_custom_call.1} parent=1 // pred_check_branch
      %40 = sbr.rel (0) target = $region17
    $region16: #{tpu_custom_call.1} parent=1 // pred_region
      %42 = dma.done [#allocation3], 512
    $region17: #{tpu_custom_call.1} parent=1 // pred_fallthru
      _
    // Predicated region
    $region18: #{tpu_custom_call.1} parent=1 // pred_check
      _
    $region19: #{tpu_custom_call.1} parent=1 // pred_check_branch
      %44 = sbr.rel (0) target = $region21
    $region20: #{tpu_custom_call.1} parent=1 // pred_region
      %46 = dma.done [#allocation6], 4096
    $region21: #{tpu_custom_call.1} parent=1 // pred_fallthru
      _
    %v47 = vld [vmem:[#allocation2] sm:$0xff]
    %v48 = vld [vmem:[#allocation2 + $0x8] sm:$0xff]
    %v49 = vld [vmem:[#allocation2 + $0x10] sm:$0xff]
    %v50 = vld [vmem:[#allocation2 + $0x18] sm:$0xff]
    %v51 = vld [vmem:[#allocation5] sm:$0xff]
    %v52 = vld [vmem:[#allocation5 + $0x8] sm:$0xff]
    %v53 = vld [vmem:[#allocation5 + $0x10] sm:$0xff]
    %v54 = vld [vmem:[#allocation5 + $0x18] sm:$0xff]
    %v55 = vld [vmem:[#allocation5 + $0x20] sm:$0xff]
    %v56 = vld [vmem:[#allocation5 + $0x28] sm:$0xff]
    %v57 = vld [vmem:[#allocation5 + $0x30] sm:$0xff]
    %v58 = vld [vmem:[#allocation5 + $0x38] sm:$0xff]
    %v59 = vld [vmem:[#allocation5 + $0x40] sm:$0xff]
    %v60 = vld [vmem:[#allocation5 + $0x48] sm:$0xff]
    %v61 = vld [vmem:[#allocation5 + $0x50] sm:$0xff]
    %v62 = vld [vmem:[#allocation5 + $0x58] sm:$0xff]
    %v63 = vld [vmem:[#allocation5 + $0x60] sm:$0xff]
    %v64 = vld [vmem:[#allocation5 + $0x68] sm:$0xff]
    %v65 = vld [vmem:[#allocation5 + $0x70] sm:$0xff]
    %v66 = vld [vmem:[#allocation5 + $0x78] sm:$0xff]
    %v67 = vld [vmem:[#allocation5 + $0x80] sm:$0xff]
    %v68 = vld [vmem:[#allocation5 + $0x88] sm:$0xff]
    %v69 = vld [vmem:[#allocation5 + $0x90] sm:$0xff]
    %v70 = vld [vmem:[#allocation5 + $0x98] sm:$0xff]
    %v71 = vld [vmem:[#allocation5 + $0xa0] sm:$0xff]
    %v72 = vld [vmem:[#allocation5 + $0xa8] sm:$0xff]
    %v73 = vld [vmem:[#allocation5 + $0xb0] sm:$0xff]
    %v74 = vld [vmem:[#allocation5 + $0xb8] sm:$0xff]
    %v75 = vld [vmem:[#allocation5 + $0xc0] sm:$0xff]
    %v76 = vld [vmem:[#allocation5 + $0xc8] sm:$0xff]
    %v77 = vld [vmem:[#allocation5 + $0xd0] sm:$0xff]
    %v78 = vld [vmem:[#allocation5 + $0xd8] sm:$0xff]
    %v79 = vld [vmem:[#allocation5 + $0xe0] sm:$0xff]
    %v80 = vld [vmem:[#allocation5 + $0xe8] sm:$0xff]
    %v81 = vld [vmem:[#allocation5 + $0xf0] sm:$0xff]
    %v82 = vld [vmem:[#allocation5 + $0xf8] sm:$0xff]
    %v83 = vld [vmem:[%s2] sm:$0x1]
    %v85 = vperm.slane %v83, 0
    %87 = vmatpush.msra.mxu0 %v66
    %88 = vmatpush.msra.mxu0 %v65
    %89 = vmatpush.msra.mxu0 %v64
    %90 = vmatpush.msra.mxu0 %v63
    %91 = vmatpush.msra.mxu0 %v62
    %92 = vmatpush.msra.mxu0 %v61
    %93 = vmatpush.msra.mxu0 %v60
    %94 = vmatpush.msra.mxu0 %v59
    %95 = vmatpush.msra.mxu0 %v58
    %96 = vmatpush.msra.mxu0 %v57
    %97 = vmatpush.msra.mxu0 %v56
    %98 = vmatpush.msra.mxu0 %v55
    %99 = vmatpush.msra.mxu0 %v54
    %100 = vmatpush.msra.mxu0 %v53
    %101 = vmatpush.msra.mxu0 %v52
    %102 = vmatpush.msra.mxu0 %v51
    %103 = vmatmul.f32.gmra.mxu0 %v47
    %v104 = vpop.f32.mrf.mxu0
    %v105 = vadd.f32 %v85, %v104
    %106 = vmatmul.f32.gmra.mxu0 %v49
    %v107 = vpop.f32.mrf.mxu0
    %v108 = vadd.f32 %v85, %v107
    %109 = vdwg.mxu0
    %110 = vmatpush.msra.mxu0 %v82
    %111 = vmatpush.msra.mxu0 %v81
    %112 = vmatpush.msra.mxu0 %v80
    %113 = vmatpush.msra.mxu0 %v79
    %114 = vmatpush.msra.mxu0 %v78
    %115 = vmatpush.msra.mxu0 %v77
    %116 = vmatpush.msra.mxu0 %v76
    %117 = vmatpush.msra.mxu0 %v75
    %118 = vmatpush.msra.mxu0 %v74
    %119 = vmatpush.msra.mxu0 %v73
    %120 = vmatpush.msra.mxu0 %v72
    %121 = vmatpush.msra.mxu0 %v71
    %122 = vmatpush.msra.mxu0 %v70
    %123 = vmatpush.msra.mxu0 %v69
    %124 = vmatpush.msra.mxu0 %v68
    %125 = vmatpush.msra.mxu0 %v67
    %126 = vmatmul.f32.gmra.mxu0 %v48
    %v127 = vpop.f32.mrf.mxu0
    %v128 = vadd.f32 %v105, %v127
    %129 = vmatmul.f32.gmra.mxu0 %v50
    %v130 = vpop.f32.mrf.mxu0
    %v131 = vadd.f32 %v108, %v130
    %132 = vdwg.mxu0
    %133 = vst [vmem:[#allocation7] sm:$0xff] %v128
    %134 = vst [vmem:[#allocation7 + $0x8] sm:$0xff] %v131
    // Predicated region
    $region22: #{tpu_custom_call.1} parent=1 // pred_check
      _
    $region23: #{tpu_custom_call.1} parent=1 // pred_check_branch
      %136 = sbr.rel (0) target = $region25
    $region24: #{tpu_custom_call.1} parent=1 // pred_region
      %138 = vsyncadd [#allocation4], 0
      %s139 = sshll.u32 [#allocation7], 4
      %s140 = int_to_ptr.vmem [resolvable:$true] %s139
      %s141 = sshll.u32 %s3, 4
      %s142 = int_to_ptr.hbm [resolvable:$true] %s141
      %147 = dma.vmem_to_hbm [thread:$0]  %s140, 256, %s142, [#allocation4], 128, 128, 8
    $region25: #{tpu_custom_call.1} parent=1 // pred_fallthru
      _
    // Predicated region
    $region26: #{tpu_custom_call.1} parent=1 // pred_check
      _
    $region27: #{tpu_custom_call.1} parent=1 // pred_check_branch
      %149 = sbr.rel (0) target = $region29
    $region28: #{tpu_custom_call.1} parent=1 // pred_region
      %151 = dma.done [#allocation4], 256
    $region29: #{tpu_custom_call.1} parent=1 // pred_fallthru
      _
    %152 = vsyncpa [#allocation3], 1
    %153 = vsyncpa [#allocation6], 1
    %154 = vsyncpa [#allocation4], 1

</llo_original>
